<compile_context>
chip_gen: v7x
topology: tpu7x:2x2x1
jax: 0.10.0
libtpu: 0.0.40
codegen_flags: <defaults>
</compile_context>

<pallas_src>
import jax
import jax.numpy as jnp
from jax.experimental import pallas as pl
from jax.experimental.pallas import tpu as pltpu

BN_EPS = 1e-5
LANES = 128
SUBLANES = 8


# -----------------------------------------------------------------------------
# Pallas kernel: full Linear->ReLU chain (BN already folded) + output affine
# -----------------------------------------------------------------------------
def build_dense_control_kernel(num_layers):
    """num_layers == num_layer - 1 (number of nn.Linear in dense_control_block)."""

    def kernel(x_ref, *refs):
        w_refs = refs[:num_layers]
        b_ref = refs[num_layers]          # [L, max_out_pad] f32 (stacked biases)
        post_ref = refs[num_layers + 1]   # [2, out_pad_last] f32 (a row, c row)
        out_ref = refs[num_layers + 2]

        h = x_ref[...]
        z = None
        for i in range(num_layers):
            w = w_refs[i][...]            # [in_pad, out_pad] compute dtype
            fo = w.shape[1]
            # MXU matmul in compute dtype, f32 accumulation.
            z = jnp.dot(h.astype(w.dtype), w, preferred_element_type=jnp.float32)
            # Slice the bias row from the ref *here* so its live range is one
            # layer, not the whole chain.  Bias + ReLU in f32.
            z = jnp.maximum(z + b_ref[i : i + 1, :fo], 0.0)
            # nn.Dropout -> identity (eval mode); BN already folded forward.
            h = z

        # Trailing BatchNorm (after the last Linear+ReLU) as a fused affine.
        # `post` is only loaded now (narrow live range).
        post = post_ref[...]
        out_ref[...] = (z * post[0:1, :] + post[1:2, :]).astype(out_ref.dtype)

    return kernel


# -----------------------------------------------------------------------------
# Wrapper glue: BN folding, lane padding, bias stacking, pallas_call
# -----------------------------------------------------------------------------
def _pad_to(n, m):
    return ((n + m - 1) // m) * m


def _choose_batch_tile(b):
    """MXU-friendly batch tiles; batch is zero-padded up to a multiple of tb."""
    if b >= 512:
        return 256                      # full-M tiles, >=2 grid steps (v7x 2 TCs)
    if b >= 256:
        return 128                      # keeps >=2 grid steps for core sharding
    return _pad_to(max(b, SUBLANES), SUBLANES)   # single sublane-aligned tile


def prepare_kernel_params(params, compute_dtype):
    dense = params["dense"]                  # list of (w [in,out] f32, b [out] f32)
    bn = params["bn"]                        # dict i -> (gamma, beta, mean, var)
    num_layers = len(dense)

    # Eval BN as affine: BN(h) = h * a + c
    affines = {}
    for i, (g, beta, mean, var) in bn.items():
        a = g * jax.lax.rsqrt(var + BN_EPS)
        affines[i] = (a, beta - mean * a)

    # Fold BN after layer (i-1) into Linear i (BN sits after ReLU, so it folds
    # forward, not backward).
    folded = []
    for i in range(num_layers):
        w, b = dense[i]
        if (i - 1) in affines:
            a, c = affines[i - 1]
            b = b + c @ w                    # uses original w
            w = a[:, None] * w
        folded.append((w, b))

    # BN after the last Linear (if any) -> output affine.
    fo_last = dense[-1][0].shape[1]
    if (num_layers - 1) in affines:
        post_a, post_c = affines[num_layers - 1]
    else:
        post_a = jnp.ones((fo_last,), jnp.float32)
        post_c = jnp.zeros((fo_last,), jnp.float32)

    # Zero-pad every output width to a multiple of 128 lanes; pad each layer's
    # input width to the previous layer's padded output width (zero rows).
    ws_p, bs_p = [], []
    prev_fo_p = None
    for i, (w, b) in enumerate(folded):
        fi, fo = w.shape
        fo_p = _pad_to(fo, LANES)
        fi_p = fi if i == 0 else prev_fo_p
        w_p = jnp.zeros((fi_p, fo_p), jnp.float32).at[:fi, :fo].set(w)
        b_p = jnp.zeros((fo_p,), jnp.float32).at[:fo].set(b)
        ws_p.append(w_p.astype(compute_dtype))
        bs_p.append(b_p)
        prev_fo_p = fo_p

    max_fo_p = max(b.shape[0] for b in bs_p)
    b_stack = jnp.stack(
        [jnp.zeros((max_fo_p,), jnp.float32).at[: b.shape[0]].set(b) for b in bs_p]
    )

    fo_last_p = ws_p[-1].shape[1]
    post = jnp.zeros((2, fo_last_p), jnp.float32)
    post = post.at[0, :fo_last].set(post_a).at[1, :fo_last].set(post_c)

    return ws_p, b_stack, post, fo_last


def _vmem_limit_bytes(ws_p, b_stack, post, tb, in_dim, out_p, in_isz, out_isz):
    """Footprint-derived scoped-VMEM limit (params single-buffered, I/O double)."""
    w_bytes = sum(int(w.size) * w.dtype.itemsize for w in ws_p)   # Buffered(1)
    param_bytes = (int(b_stack.size) + int(post.size)) * 4
    io_bytes = 2 * tb * in_dim * in_isz + 2 * tb * out_p * out_isz
    max_fo = max(w.shape[1] for w in ws_p)
    tmp_bytes = 3 * tb * max_fo * 4                               # f32 intermediates
    total = w_bytes + param_bytes + io_bytes + tmp_bytes
    # 2x headroom; floor at the 32 MiB scoped default, cap at 64 MiB so the
    # same setting is valid on v5e/v6e/v7x (v7x physical VMEM is 64 MiB/TC).
    return int(min(max(2 * total + (4 << 20), 32 << 20), 64 << 20))


def dense_control_forward(x, params, compute_dtype=jnp.bfloat16):
    """Mirrors dense_control_block.forward (eval mode)."""
    ws_p, b_stack, post, out_dim = prepare_kernel_params(params, compute_dtype)
    num_layers = len(ws_p)
    B, in_dim = x.shape
    out_dtype = x.dtype
    out_p = ws_p[-1].shape[1]

    # MXU-friendly batch tiling: zero-pad batch to a multiple of the tile.
    tb = _choose_batch_tile(B)
    B_pad = _pad_to(B, tb)
    x_in = x.astype(compute_dtype)          # halves input DMA on the bf16 path
    if B_pad != B:
        x_in = jnp.pad(x_in, ((0, B_pad - B), (0, 0)))
    grid = (B_pad // tb,)

    # Grid-invariant parameters are single-buffered: their block index never
    # changes, so default double-buffering is pure VMEM waste.
    invariant = pl.Buffered(1)
    in_specs = [pl.BlockSpec((tb, in_dim), lambda i: (i, 0))]
    in_specs += [
        pl.BlockSpec(w.shape, lambda i: (0, 0), pipeline_mode=invariant)
        for w in ws_p
    ]
    in_specs += [
        pl.BlockSpec(b_stack.shape, lambda i: (0, 0), pipeline_mode=invariant),
        pl.BlockSpec(post.shape, lambda i: (0, 0), pipeline_mode=invariant),
    ]
    out_specs = pl.BlockSpec((tb, out_p), lambda i: (i, 0))
    out_shape = jax.ShapeDtypeStruct((B_pad, out_p), out_dtype)

    vmem_limit = _vmem_limit_bytes(
        ws_p, b_stack, post, tb, in_dim, out_p,
        x_in.dtype.itemsize, x.dtype.itemsize,
    )

    y_pad = pl.pallas_call(
        build_dense_control_kernel(num_layers),
        grid=grid,
        in_specs=in_specs,
        out_specs=out_specs,
        out_shape=out_shape,
        compiler_params=pltpu.CompilerParams(
            dimension_semantics=("parallel",),
            vmem_limit_bytes=vmem_limit,
        ),
    )(x_in, *ws_p, b_stack, post)

    return y_pad[:B, :out_dim]


# -----------------------------------------------------------------------------
# Deterministic parameter initialization (PyTorch-like uniform init)
# -----------------------------------------------------------------------------
def init_params(key, input_dim, num_layer, scale=2, scale_type="exp"):
    if scale_type == "exp":
        dims = [input_dim * scale**i for i in range(num_layer)]
    else:  # 'mul'
        dims = [input_dim + input_dim * (scale * i) for i in range(num_layer)]

    params = {"dense": [], "bn": {}, "last_dim": dims[-1]}
    n_lin = num_layer - 1
    keys = jax.random.split(key, 2 * n_lin)
    for i, (fi, fo) in enumerate(zip(dims[:-1], dims[1:])):
        bound = 1.0 / (fi**0.5)
        # stored as [in, out] (pre-transposed relative to torch's [out, in])
        w = jax.random.uniform(keys[2 * i], (fi, fo), jnp.float32, -bound, bound)
        b = jax.random.uniform(keys[2 * i + 1], (fo,), jnp.float32, -bound, bound)
        params["dense"].append((w, b))
        if i != 0:
            # Non-trivial "running" stats so the BN-folding path is actually
            # exercised (PyTorch defaults are weight=1, bias=0, mean=0, var=1).
            kg, kb, km, kv = jax.random.split(jax.random.fold_in(key, 1000 + i), 4)
            params["bn"][i] = (
                jax.random.uniform(kg, (fo,), jnp.float32, 0.8, 1.2),   # weight
                0.1 * jax.random.normal(kb, (fo,), jnp.float32),        # bias
                0.1 * jax.random.normal(km, (fo,), jnp.float32),        # running_mean
                jax.random.uniform(kv, (fo,), jnp.float32, 0.5, 1.5),   # running_var
            )
    return params


# -----------------------------------------------------------------------------
# Pure-JAX reference (module structure, eval mode) for validation
# -----------------------------------------------------------------------------
def reference_forward(x, params):
    h = x
    for i, (w, b) in enumerate(params["dense"]):
        h = jnp.maximum(h @ w + b, 0.0)           # Linear -> ReLU
        if i != 0:
            # Dropout -> identity (eval); BatchNorm1d with running stats
            g, beta, mean, var = params["bn"][i]
            h = (h - mean) / jnp.sqrt(var + BN_EPS) * g + beta
    return h


if __name__ == "__main__":
    # dense_control_block(input_dim=16, num_layer=4, scale=2) -> dims [16,32,64,128]
    # condition embedding x: [batch=2, input_dim=16]
    B, input_dim, num_layer, scale = 2, 16, 4, 2

    root = jax.random.PRNGKey(0)
    k_params, k_x = jax.random.split(root)
    params = init_params(k_params, input_dim, num_layer, scale)
    x = jax.random.normal(k_x, (B, input_dim), jnp.float32)

    y_ref = reference_forward(x, params)

    # f32 compute path: strict check of the fused kernel + BN fold + padding.
    y_f32 = dense_control_forward(x, params, compute_dtype=jnp.float32)
    jax.block_until_ready(y_f32)
    assert y_f32.shape == y_ref.shape
    assert jnp.allclose(y_f32, y_ref, atol=1e-4, rtol=1e-4)

    # bf16 compute path (default, fast MXU path): looser tolerance vs f32 reference.
    y_bf16 = dense_control_forward(x, params, compute_dtype=jnp.bfloat16)
    jax.block_until_ready(y_bf16)
    assert y_bf16.shape == y_ref.shape
    assert jnp.allclose(y_bf16, y_ref, atol=1e-1, rtol=1e-1)

    print("KERNEL_OK")
</pallas_src>

<mosaic_0001>
module attributes {stable_mosaic.version = 11 : i64} {
  func.func @kernel(%arg0: i32, %arg1: memref<8x16xf32, #tpu.memory_space<vmem>>, %arg2: memref<16x128xf32, #tpu.memory_space<vmem>>, %arg3: memref<128x128xf32, #tpu.memory_space<vmem>>, %arg4: memref<128x128xf32, #tpu.memory_space<vmem>>, %arg5: memref<3x128xf32, #tpu.memory_space<vmem>>, %arg6: memref<2x128xf32, #tpu.memory_space<vmem>>, %arg7: memref<8x128xf32, #tpu.memory_space<vmem>>) attributes {dimension_semantics = [#tpu.dimension_semantics<parallel>], iteration_bounds = array<i64: 1>, scalar_prefetch = 0 : i64, scratch_operands = 0 : i64, tpu.core_type = #tpu.core_type<tc>, window_params = [{transform_indices = @transform_0, window_bounds = array<i64: 8, 16>}, {pipeline_mode = #tpu.pipeline_mode<synchronous>, transform_indices = @transform_1, window_bounds = array<i64: 16, 128>}, {pipeline_mode = #tpu.pipeline_mode<synchronous>, transform_indices = @transform_2, window_bounds = array<i64: 128, 128>}, {pipeline_mode = #tpu.pipeline_mode<synchronous>, transform_indices = @transform_3, window_bounds = array<i64: 128, 128>}, {pipeline_mode = #tpu.pipeline_mode<synchronous>, transform_indices = @transform_4, window_bounds = array<i64: 3, 128>}, {pipeline_mode = #tpu.pipeline_mode<synchronous>, transform_indices = @transform_5, window_bounds = array<i64: 2, 128>}, {transform_indices = @transform_6, window_bounds = array<i64: 8, 128>}]} {
    %c0 = arith.constant 0 : index
    %c0_0 = arith.constant 0 : index
    %0 = vector.load %arg1[%c0, %c0_0] : memref<8x16xf32, #tpu.memory_space<vmem>>, vector<8x16xf32>
    %c0_1 = arith.constant 0 : index
    %c0_2 = arith.constant 0 : index
    %1 = vector.load %arg2[%c0_1, %c0_2] : memref<16x128xf32, #tpu.memory_space<vmem>>, vector<16x128xf32>
    %cst = arith.constant dense<0.000000e+00> : vector<8x128xf32>
    %2 = tpu.matmul %0, %1, %cst {dimension_numbers = #tpu.dot_dimension_numbers<[1], [0], [0], [1], [0, 0, 1, 1], [], []>} : vector<8x16xf32>, vector<16x128xf32>, vector<8x128xf32> -> vector<8x128xf32>
    %c0_3 = arith.constant 0 : index
    %c0_4 = arith.constant 0 : index
    %3 = vector.load %arg5[%c0_3, %c0_4] : memref<3x128xf32, #tpu.memory_space<vmem>>, vector<1x128xf32>
    %4 = vector.broadcast %3 : vector<1x128xf32> to vector<8x128xf32>
    %5 = arith.addf %2, %4 : vector<8x128xf32>
    %cst_5 = arith.constant 0.000000e+00 : f32
    %6 = vector.broadcast %cst_5 : f32 to vector<8x128xf32>
    %7 = arith.maximumf %5, %6 : vector<8x128xf32>
    %c0_6 = arith.constant 0 : index
    %c0_7 = arith.constant 0 : index
    %8 = vector.load %arg3[%c0_6, %c0_7] : memref<128x128xf32, #tpu.memory_space<vmem>>, vector<128x128xf32>
    %cst_8 = arith.constant dense<0.000000e+00> : vector<8x128xf32>
    %9 = tpu.matmul %7, %8, %cst_8 {dimension_numbers = #tpu.dot_dimension_numbers<[1], [0], [0], [1], [0, 0, 1, 1], [], []>} : vector<8x128xf32>, vector<128x128xf32>, vector<8x128xf32> -> vector<8x128xf32>
    %c1 = arith.constant 1 : index
    %c0_9 = arith.constant 0 : index
    %10 = vector.load %arg5[%c1, %c0_9] : memref<3x128xf32, #tpu.memory_space<vmem>>, vector<1x128xf32>
    %11 = vector.broadcast %10 : vector<1x128xf32> to vector<8x128xf32>
    %12 = arith.addf %9, %11 : vector<8x128xf32>
    %cst_10 = arith.constant 0.000000e+00 : f32
    %13 = vector.broadcast %cst_10 : f32 to vector<8x128xf32>
    %14 = arith.maximumf %12, %13 : vector<8x128xf32>
    %c0_11 = arith.constant 0 : index
    %c0_12 = arith.constant 0 : index
    %15 = vector.load %arg4[%c0_11, %c0_12] : memref<128x128xf32, #tpu.memory_space<vmem>>, vector<128x128xf32>
    %cst_13 = arith.constant dense<0.000000e+00> : vector<8x128xf32>
    %16 = tpu.matmul %14, %15, %cst_13 {dimension_numbers = #tpu.dot_dimension_numbers<[1], [0], [0], [1], [0, 0, 1, 1], [], []>} : vector<8x128xf32>, vector<128x128xf32>, vector<8x128xf32> -> vector<8x128xf32>
    %c2 = arith.constant 2 : index
    %c0_14 = arith.constant 0 : index
    %17 = vector.load %arg5[%c2, %c0_14] : memref<3x128xf32, #tpu.memory_space<vmem>>, vector<1x128xf32>
    %18 = vector.broadcast %17 : vector<1x128xf32> to vector<8x128xf32>
    %19 = arith.addf %16, %18 : vector<8x128xf32>
    %cst_15 = arith.constant 0.000000e+00 : f32
    %20 = vector.broadcast %cst_15 : f32 to vector<8x128xf32>
    %21 = arith.maximumf %19, %20 : vector<8x128xf32>
    %c0_16 = arith.constant 0 : index
    %c0_17 = arith.constant 0 : index
    %22 = vector.load %arg6[%c0_16, %c0_17] : memref<2x128xf32, #tpu.memory_space<vmem>>, vector<2x128xf32>
    %23 = vector.extract_strided_slice %22 {offsets = [0, 0], sizes = [1, 128], strides = [1, 1]} : vector<2x128xf32> to vector<1x128xf32>
    %24 = vector.broadcast %23 : vector<1x128xf32> to vector<8x128xf32>
    %25 = arith.mulf %21, %24 : vector<8x128xf32>
    %26 = vector.extract_strided_slice %22 {offsets = [1, 0], sizes = [1, 128], strides = [1, 1]} : vector<2x128xf32> to vector<1x128xf32>
    %27 = vector.broadcast %26 : vector<1x128xf32> to vector<8x128xf32>
    %28 = arith.addf %25, %27 : vector<8x128xf32>
    %c0_18 = arith.constant 0 : index
    %c0_19 = arith.constant 0 : index
    %29 = vector.load %arg7[%c0_18, %c0_19] : memref<8x128xf32, #tpu.memory_space<vmem>>, vector<8x128xf32>
    tpu.vector_store %arg7[%c0_18, %c0_19], %28 {strides = array<i32>} : memref<8x128xf32, #tpu.memory_space<vmem>>, vector<8x128xf32>,
    return
  }
  func.func @transform_0(%arg0: i32) -> (i32, i32) {
    %c0_i32 = arith.constant 0 : i32
    %c0_i32_0 = arith.constant 0 : i32
    return %arg0, %c0_i32 : i32, i32
  }
  func.func @transform_1(%arg0: i32) -> (i32, i32) {
    %c0_i32 = arith.constant 0 : i32
    %c0_i32_0 = arith.constant 0 : i32
    %c0_i32_1 = arith.constant 0 : i32
    return %c0_i32, %c0_i32_0 : i32, i32
  }
  func.func @transform_2(%arg0: i32) -> (i32, i32) {
    %c0_i32 = arith.constant 0 : i32
    %c0_i32_0 = arith.constant 0 : i32
    %c0_i32_1 = arith.constant 0 : i32
    return %c0_i32, %c0_i32_0 : i32, i32
  }
  func.func @transform_3(%arg0: i32) -> (i32, i32) {
    %c0_i32 = arith.constant 0 : i32
    %c0_i32_0 = arith.constant 0 : i32
    %c0_i32_1 = arith.constant 0 : i32
    return %c0_i32, %c0_i32_0 : i32, i32
  }
  func.func @transform_4(%arg0: i32) -> (i32, i32) {
    %c0_i32 = arith.constant 0 : i32
    %c0_i32_0 = arith.constant 0 : i32
    %c0_i32_1 = arith.constant 0 : i32
    return %c0_i32, %c0_i32_0 : i32, i32
  }
  func.func @transform_5(%arg0: i32) -> (i32, i32) {
    %c0_i32 = arith.constant 0 : i32
    %c0_i32_0 = arith.constant 0 : i32
    %c0_i32_1 = arith.constant 0 : i32
    return %c0_i32, %c0_i32_0 : i32, i32
  }
  func.func @transform_6(%arg0: i32) -> (i32, i32) {
    %c0_i32 = arith.constant 0 : i32
    %c0_i32_0 = arith.constant 0 : i32
    return %arg0, %c0_i32 : i32, i32
  }
}

</mosaic_0001>

<llo_original>
// kernel: tpu_custom_call.1
$region0: #{tpu_custom_call.1}
  #allocation0 [shape = 'u32[]', space=smem, size = 0x4, offset = 0x4, fixed_abs, tag = 'smem constant byte address 0x4 - core index']
  #allocation1 [shape = 'u32[144,128]{1,0:T(1,128)}', space=vmem, size = 0x12000, scoped, tag = 'internal scratch']
  %s0 = inlined_call_operand.hbm [shape: f32[8,16], index: 0, kind: input, shape index: {}]
  %s1 = inlined_call_operand.hbm [shape: f32[16,128], index: 1, kind: input, shape index: {}]
  %s2 = inlined_call_operand.hbm [shape: f32[128,128], index: 2, kind: input, shape index: {}]
  %s3 = inlined_call_operand.hbm [shape: f32[128,128], index: 3, kind: input, shape index: {}]
  %s4 = inlined_call_operand.vmem [shape: f32[3,128], index: 4, kind: input, shape index: {}]
  %s5 = inlined_call_operand.vmem [shape: f32[2,128], index: 5, kind: input, shape index: {}]
  %s6 = inlined_call_operand.hbm [shape: f32[8,128], index: 6, kind: output, shape index: {}]
  %s7 = sld [smem:[#allocation0]]
  $region50: #{tpu_custom_call.1} parent=0
    _
  %s9 = ssub.s32 1, %s7
  %s10 = scalar_select 0, %s9, %s7
  $region1: #{tpu_custom_call.1} parent=0
    #allocation2 [shape = 'u8[4096]{0}', space=vmem, size = 0x1000, scoped, tag = 'input window, operand 0, single buffered']
    #allocation3 [shape = 's32[1]{0}', space=sflag, size = 0x4, scoped, tag = 'scoped memory for tpu_custom_call.1']
    #allocation4 [shape = 's32[1]{0}', space=sflag, size = 0x4, scoped, tag = 'scoped memory for tpu_custom_call.1']
    #allocation5 [shape = 'u8[8192]{0}', space=vmem, size = 0x2000, scoped, tag = 'input window, operand 1, single buffered']
    #allocation6 [shape = 's32[1]{0}', space=sflag, size = 0x4, scoped, tag = 'scoped memory for tpu_custom_call.1']
    #allocation7 [shape = 'u8[65536]{0}', space=vmem, size = 0x10000, scoped, tag = 'input window, operand 2, single buffered']
    #allocation8 [shape = 'u8[65536]{0}', space=vmem, size = 0x10000, scoped, tag = 'input window, operand 3, single buffered']
    #allocation9 [shape = 's32[1]{0}', space=sflag, size = 0x4, scoped, tag = 'scoped memory for tpu_custom_call.1']
    #allocation10 [shape = 'u8[4096]{0}', space=vmem, size = 0x1000, scoped, tag = 'output window, operand 0, single buffered']
    %11 = vsyncpa [#allocation3], 0
    %12 = vsyncpa [#allocation6], 0
    %13 = vsyncpa [#allocation9], 0
    %14 = vsyncpa [#allocation4], 0
    // Predicated region
    $region2: #{tpu_custom_call.1} parent=1 // pred_check
      _
    $region3: #{tpu_custom_call.1} parent=1 // pred_check_branch
      %16 = sbr.rel (0) target = $region5
    $region4: #{tpu_custom_call.1} parent=1 // pred_region
      %s18 = ssub.s32 128, 128
      %19 = vsyncadd [#allocation3], %s18
      %s21 = sshll.u32 [#allocation2], 4
      %s22 = int_to_ptr.vmem [resolvable:$true] %s21
      %24 = dma.hbm_to_vmem [thread:$0]  %s0, 128, %s22, [#allocation3]
    $region5: #{tpu_custom_call.1} parent=1 // pred_fallthru
      _
    // Predicated region
    $region6: #{tpu_custom_call.1} parent=1 // pred_check
      _
    $region7: #{tpu_custom_call.1} parent=1 // pred_check_branch
      %26 = sbr.rel (0) target = $region9
    $region8: #{tpu_custom_call.1} parent=1 // pred_region
      %s28 = ssub.s32 256, 256
      %29 = vsyncadd [#allocation6], %s28
      %s30 = sshll.u32 [#allocation5], 4
      %s31 = int_to_ptr.vmem [resolvable:$true] %s30
      %36 = dma.hbm_to_vmem [thread:$0]  %s1, 256, %s31, [#allocation6], 128, 128, 8
    $region9: #{tpu_custom_call.1} parent=1 // pred_fallthru
      _
    // Predicated region
    $region10: #{tpu_custom_call.1} parent=1 // pred_check
      _
    $region11: #{tpu_custom_call.1} parent=1 // pred_check_branch
      %38 = sbr.rel (0) target = $region13
    $region12: #{tpu_custom_call.1} parent=1 // pred_region
      %s40 = ssub.s32 2048, 2048
      %41 = vsyncadd [#allocation6], %s40
      %s42 = sshll.u32 [#allocation7], 4
      %s43 = int_to_ptr.vmem [resolvable:$true] %s42
      %48 = dma.hbm_to_vmem [thread:$0]  %s2, 2048, %s43, [#allocation6], 128, 128, 8
    $region13: #{tpu_custom_call.1} parent=1 // pred_fallthru
      _
    // Predicated region
    $region14: #{tpu_custom_call.1} parent=1 // pred_check
      _
    $region15: #{tpu_custom_call.1} parent=1 // pred_check_branch
      %50 = sbr.rel (0) target = $region17
    $region16: #{tpu_custom_call.1} parent=1 // pred_region
      %s52 = ssub.s32 2048, 2048
      %53 = vsyncadd [#allocation9], %s52
      %s54 = sshll.u32 [#allocation8], 4
      %s55 = int_to_ptr.vmem [resolvable:$true] %s54
      %60 = dma.hbm_to_vmem [thread:$0]  %s3, 2048, %s55, [#allocation9], 128, 128, 8
    $region17: #{tpu_custom_call.1} parent=1 // pred_fallthru
      _
    // Predicated region
    $region18: #{tpu_custom_call.1} parent=1 // pred_check
      _
    $region19: #{tpu_custom_call.1} parent=1 // pred_check_branch
      %62 = sbr.rel (0) target = $region21
    $region20: #{tpu_custom_call.1} parent=1 // pred_region
      _
    $region21: #{tpu_custom_call.1} parent=1 // pred_fallthru
      _
    // Predicated region
    $region22: #{tpu_custom_call.1} parent=1 // pred_check
      _
    $region23: #{tpu_custom_call.1} parent=1 // pred_check_branch
      %64 = sbr.rel (0) target = $region25
    $region24: #{tpu_custom_call.1} parent=1 // pred_region
      _
    $region25: #{tpu_custom_call.1} parent=1 // pred_fallthru
      _
    // Predicated region
    $region26: #{tpu_custom_call.1} parent=1 // pred_check
      _
    $region27: #{tpu_custom_call.1} parent=1 // pred_check_branch
      %66 = sbr.rel (0) target = $region29
    $region28: #{tpu_custom_call.1} parent=1 // pred_region
      %67 = dma.done [#allocation3], 128
    $region29: #{tpu_custom_call.1} parent=1 // pred_fallthru
      _
    // Predicated region
    $region30: #{tpu_custom_call.1} parent=1 // pred_check
      _
    $region31: #{tpu_custom_call.1} parent=1 // pred_check_branch
      %69 = sbr.rel (0) target = $region33
    $region32: #{tpu_custom_call.1} parent=1 // pred_region
      %70 = dma.done [#allocation6], 256
    $region33: #{tpu_custom_call.1} parent=1 // pred_fallthru
      _
    // Predicated region
    $region34: #{tpu_custom_call.1} parent=1 // pred_check
      _
    $region35: #{tpu_custom_call.1} parent=1 // pred_check_branch
      %72 = sbr.rel (0) target = $region37
    $region36: #{tpu_custom_call.1} parent=1 // pred_region
      %73 = dma.done [#allocation6], 2048
    $region37: #{tpu_custom_call.1} parent=1 // pred_fallthru
      _
    // Predicated region
    $region38: #{tpu_custom_call.1} parent=1 // pred_check
      _
    $region39: #{tpu_custom_call.1} parent=1 // pred_check_branch
      %75 = sbr.rel (0) target = $region41
    $region40: #{tpu_custom_call.1} parent=1 // pred_region
      %76 = dma.done [#allocation9], 2048
    $region41: #{tpu_custom_call.1} parent=1 // pred_fallthru
      _
    %v77 = vld [vmem:[#allocation2] sm:$0xff]
    %v78 = vld [vmem:[#allocation5] sm:$0xff]
    %v79 = vld [vmem:[#allocation5 + $0x8] sm:$0xff]
    %v80 = vld [vmem:[%s4] sm:$0x1]
    %v81 = vlaneseq
    %v82 = vshrl.u32 %v81, 7
    %v83 = vsub.s32 0, %v82
    %v84 = vrot.slane %v80, %v83
    %vm85 = vcmask 130048
    %v87 = vsel %vm85, %v77, 0
    %89 = vmatprep.subr.mxu0 0.0
    %90 = vmatpush1.msra.mxu0 %v78
    %91 = vmatprep.subr.mxu0 0.0
    %92 = vmatpush1.msra.mxu0 %v79
    %93 = vmatprep.subr.mxu0 0.0
    %94 = vmatpush1.msra.mxu0 0.0
    %95 = vmatprep.subr.mxu0 0.0
    %96 = vmatpush1.msra.mxu0 0.0
    %97 = vmatprep.subr.mxu0 0.0
    %98 = vmatpush1.msra.mxu0 0.0
    %99 = vmatprep.subr.mxu0 0.0
    %100 = vmatpush1.msra.mxu0 0.0
    %101 = vmatprep.subr.mxu0 0.0
    %102 = vmatpush1.msra.mxu0 0.0
    %103 = vmatprep.subr.mxu0 0.0
    %104 = vmatpush1.msra.mxu0 0.0
    %105 = vmatprep.subr.mxu0 0.0
    %106 = vmatpush1.msra.mxu0 0.0
    %107 = vmatprep.subr.mxu0 0.0
    %108 = vmatpush1.msra.mxu0 0.0
    %109 = vmatprep.subr.mxu0 0.0
    %110 = vmatpush1.msra.mxu0 0.0
    %111 = vmatprep.subr.mxu0 0.0
    %112 = vmatpush1.msra.mxu0 0.0
    %113 = vmatprep.subr.mxu0 0.0
    %114 = vmatpush1.msra.mxu0 0.0
    %115 = vmatprep.subr.mxu0 0.0
    %116 = vmatpush1.msra.mxu0 0.0
    %117 = vmatprep.subr.mxu0 0.0
    %118 = vmatpush1.msra.mxu0 0.0
    %119 = vmatprep.subr.mxu0 0.0
    %120 = vmatpush1.msra.mxu0 0.0
    %121 = vmatprep.subr.mxu0 0.0
    %122 = vmatpush1.msra.mxu0 0.0
    %123 = vmatprep.subr.mxu0 0.0
    %124 = vmatpush1.msra.mxu0 0.0
    %125 = vmatprep.subr.mxu0 0.0
    %126 = vmatpush1.msra.mxu0 0.0
    %127 = vmatprep.subr.mxu0 0.0
    %128 = vmatpush1.msra.mxu0 0.0
    %129 = vmatprep.subr.mxu0 0.0
    %130 = vmatpush1.msra.mxu0 0.0
    %131 = vmatprep.subr.mxu0 0.0
    %132 = vmatpush1.msra.mxu0 0.0
    %133 = vmatprep.subr.mxu0 0.0
    %134 = vmatpush1.msra.mxu0 0.0
    %135 = vmatprep.subr.mxu0 0.0
    %136 = vmatpush1.msra.mxu0 0.0
    %137 = vmatprep.subr.mxu0 0.0
    %138 = vmatpush1.msra.mxu0 0.0
    %139 = vmatprep.subr.mxu0 0.0
    %140 = vmatpush1.msra.mxu0 0.0
    %141 = vmatprep.subr.mxu0 0.0
    %142 = vmatpush1.msra.mxu0 0.0
    %143 = vmatprep.subr.mxu0 0.0
    %144 = vmatpush1.msra.mxu0 0.0
    %145 = vmatprep.subr.mxu0 0.0
    %146 = vmatpush1.msra.mxu0 0.0
    %147 = vmatprep.subr.mxu0 0.0
    %148 = vmatpush1.msra.mxu0 0.0
    %149 = vmatprep.subr.mxu0 0.0
    %150 = vmatpush1.msra.mxu0 0.0
    %151 = vmatprep.subr.mxu0 0.0
    %152 = vmatpush1.msra.mxu0 0.0
    %153 = vmatprep.mubr.f32.mxu0 0.0
    %154 = vmatmul.mubr.f32.gmra.mrb[0].mxu0 %v87
    %v155 = vpop.f32.mrb[0].mxu0
    %v156 = vadd.f32 %v84, %v155
    %v157 = vpop.f32.mrb[0].mxu0
    %158 = vdwg.mxu0
    %v159 = vmax.f32 %v156, 0.0
    %v160 = vld [vmem:[#allocation7] sm:$0xff]
    %v161 = vld [vmem:[#allocation7 + $0x8] sm:$0xff]
    %v162 = vld [vmem:[#allocation7 + $0x10] sm:$0xff]
    %v163 = vld [vmem:[#allocation7 + $0x18] sm:$0xff]
    %v164 = vld [vmem:[#allocation7 + $0x20] sm:$0xff]
    %v165 = vld [vmem:[#allocation7 + $0x28] sm:$0xff]
    %v166 = vld [vmem:[#allocation7 + $0x30] sm:$0xff]
    %v167 = vld [vmem:[#allocation7 + $0x38] sm:$0xff]
    %v168 = vld [vmem:[#allocation7 + $0x40] sm:$0xff]
    %v169 = vld [vmem:[#allocation7 + $0x48] sm:$0xff]
    %v170 = vld [vmem:[#allocation7 + $0x50] sm:$0xff]
    %v171 = vld [vmem:[#allocation7 + $0x58] sm:$0xff]
    %v172 = vld [vmem:[#allocation7 + $0x60] sm:$0xff]
    %v173 = vld [vmem:[#allocation7 + $0x68] sm:$0xff]
    %v174 = vld [vmem:[#allocation7 + $0x70] sm:$0xff]
    %v175 = vld [vmem:[#allocation7 + $0x78] sm:$0xff]
    %v176 = vld [vmem:[%s4 + $0x1] sm:$0x1]
    %v177 = vlaneseq
    %v178 = vshrl.u32 %v177, 7
    %v179 = vsub.s32 0, %v178
    %v180 = vrot.slane %v176, %v179
    %181 = vmatprep.subr.mxu0 0.0
    %182 = vmatpush1.msra.mxu0 %v160
    %183 = vmatprep.subr.mxu0 0.0
    %184 = vmatpush1.msra.mxu0 %v161
    %185 = vmatprep.subr.mxu0 0.0
    %186 = vmatpush1.msra.mxu0 %v162
    %187 = vmatprep.subr.mxu0 0.0
    %188 = vmatpush1.msra.mxu0 %v163
    %189 = vmatprep.subr.mxu0 0.0
    %190 = vmatpush1.msra.mxu0 %v164
    %191 = vmatprep.subr.mxu0 0.0
    %192 = vmatpush1.msra.mxu0 %v165
    %193 = vmatprep.subr.mxu0 0.0
    %194 = vmatpush1.msra.mxu0 %v166
    %195 = vmatprep.subr.mxu0 0.0
    %196 = vmatpush1.msra.mxu0 %v167
    %197 = vmatprep.subr.mxu0 0.0
    %198 = vmatpush1.msra.mxu0 %v168
    %199 = vmatprep.subr.mxu0 0.0
    %200 = vmatpush1.msra.mxu0 %v169
    %201 = vmatprep.subr.mxu0 0.0
    %202 = vmatpush1.msra.mxu0 %v170
    %203 = vmatprep.subr.mxu0 0.0
    %204 = vmatpush1.msra.mxu0 %v171
    %205 = vmatprep.subr.mxu0 0.0
    %206 = vmatpush1.msra.mxu0 %v172
    %207 = vmatprep.subr.mxu0 0.0
    %208 = vmatpush1.msra.mxu0 %v173
    %209 = vmatprep.subr.mxu0 0.0
    %210 = vmatpush1.msra.mxu0 %v174
    %211 = vmatprep.subr.mxu0 0.0
    %212 = vmatpush1.msra.mxu0 %v175
    %213 = vmatprep.subr.mxu0 0.0
    %214 = vmatpush1.msra.mxu0 0.0
    %215 = vmatprep.subr.mxu0 0.0
    %216 = vmatpush1.msra.mxu0 0.0
    %217 = vmatprep.subr.mxu0 0.0
    %218 = vmatpush1.msra.mxu0 0.0
    %219 = vmatprep.subr.mxu0 0.0
    %220 = vmatpush1.msra.mxu0 0.0
    %221 = vmatprep.subr.mxu0 0.0
    %222 = vmatpush1.msra.mxu0 0.0
    %223 = vmatprep.subr.mxu0 0.0
    %224 = vmatpush1.msra.mxu0 0.0
    %225 = vmatprep.subr.mxu0 0.0
    %226 = vmatpush1.msra.mxu0 0.0
    %227 = vmatprep.subr.mxu0 0.0
    %228 = vmatpush1.msra.mxu0 0.0
    %229 = vmatprep.subr.mxu0 0.0
    %230 = vmatpush1.msra.mxu0 0.0
    %231 = vmatprep.subr.mxu0 0.0
    %232 = vmatpush1.msra.mxu0 0.0
    %233 = vmatprep.subr.mxu0 0.0
    %234 = vmatpush1.msra.mxu0 0.0
    %235 = vmatprep.subr.mxu0 0.0
    %236 = vmatpush1.msra.mxu0 0.0
    %237 = vmatprep.subr.mxu0 0.0
    %238 = vmatpush1.msra.mxu0 0.0
    %239 = vmatprep.subr.mxu0 0.0
    %240 = vmatpush1.msra.mxu0 0.0
    %241 = vmatprep.subr.mxu0 0.0
    %242 = vmatpush1.msra.mxu0 0.0
    %243 = vmatprep.subr.mxu0 0.0
    %244 = vmatpush1.msra.mxu0 0.0
    %245 = vmatprep.mubr.f32.mxu0 0.0
    %246 = vmatmul.mubr.f32.gmra.mrb[0].mxu0 %v159
    %v247 = vpop.f32.mrb[0].mxu0
    %v248 = vadd.f32 %v180, %v247
    %v249 = vpop.f32.mrb[0].mxu0
    %250 = vdwg.mxu0
    %v251 = vmax.f32 %v248, 0.0
    %v252 = vld [vmem:[#allocation8] sm:$0xff]
    %v253 = vld [vmem:[#allocation8 + $0x8] sm:$0xff]
    %v254 = vld [vmem:[#allocation8 + $0x10] sm:$0xff]
    %v255 = vld [vmem:[#allocation8 + $0x18] sm:$0xff]
    %v256 = vld [vmem:[#allocation8 + $0x20] sm:$0xff]
    %v257 = vld [vmem:[#allocation8 + $0x28] sm:$0xff]
    %v258 = vld [vmem:[#allocation8 + $0x30] sm:$0xff]
    %v259 = vld [vmem:[#allocation8 + $0x38] sm:$0xff]
    %v260 = vld [vmem:[#allocation8 + $0x40] sm:$0xff]
    %v261 = vld [vmem:[#allocation8 + $0x48] sm:$0xff]
    %v262 = vld [vmem:[#allocation8 + $0x50] sm:$0xff]
    %v263 = vld [vmem:[#allocation8 + $0x58] sm:$0xff]
    %v264 = vld [vmem:[#allocation8 + $0x60] sm:$0xff]
    %v265 = vld [vmem:[#allocation8 + $0x68] sm:$0xff]
    %v266 = vld [vmem:[#allocation8 + $0x70] sm:$0xff]
    %v267 = vld [vmem:[#allocation8 + $0x78] sm:$0xff]
    %v268 = vld [vmem:[%s4 + $0x2] sm:$0x1]
    %v269 = vlaneseq
    %v270 = vshrl.u32 %v269, 7
    %v271 = vsub.s32 0, %v270
    %v272 = vrot.slane %v268, %v271
    %273 = vmatprep.subr.mxu0 0.0
    %274 = vmatpush1.msra.mxu0 %v252
    %275 = vmatprep.subr.mxu0 0.0
    %276 = vmatpush1.msra.mxu0 %v253
    %277 = vmatprep.subr.mxu0 0.0
    %278 = vmatpush1.msra.mxu0 %v254
    %279 = vmatprep.subr.mxu0 0.0
    %280 = vmatpush1.msra.mxu0 %v255
    %281 = vmatprep.subr.mxu0 0.0
    %282 = vmatpush1.msra.mxu0 %v256
    %283 = vmatprep.subr.mxu0 0.0
    %284 = vmatpush1.msra.mxu0 %v257
    %285 = vmatprep.subr.mxu0 0.0
    %286 = vmatpush1.msra.mxu0 %v258
    %287 = vmatprep.subr.mxu0 0.0
    %288 = vmatpush1.msra.mxu0 %v259
    %289 = vmatprep.subr.mxu0 0.0
    %290 = vmatpush1.msra.mxu0 %v260
    %291 = vmatprep.subr.mxu0 0.0
    %292 = vmatpush1.msra.mxu0 %v261
    %293 = vmatprep.subr.mxu0 0.0
    %294 = vmatpush1.msra.mxu0 %v262
    %295 = vmatprep.subr.mxu0 0.0
    %296 = vmatpush1.msra.mxu0 %v263
    %297 = vmatprep.subr.mxu0 0.0
    %298 = vmatpush1.msra.mxu0 %v264
    %299 = vmatprep.subr.mxu0 0.0
    %300 = vmatpush1.msra.mxu0 %v265
    %301 = vmatprep.subr.mxu0 0.0
    %302 = vmatpush1.msra.mxu0 %v266
    %303 = vmatprep.subr.mxu0 0.0
    %304 = vmatpush1.msra.mxu0 %v267
    %305 = vmatprep.subr.mxu0 0.0
    %306 = vmatpush1.msra.mxu0 0.0
    %307 = vmatprep.subr.mxu0 0.0
    %308 = vmatpush1.msra.mxu0 0.0
    %309 = vmatprep.subr.mxu0 0.0
    %310 = vmatpush1.msra.mxu0 0.0
    %311 = vmatprep.subr.mxu0 0.0
    %312 = vmatpush1.msra.mxu0 0.0
    %313 = vmatprep.subr.mxu0 0.0
    %314 = vmatpush1.msra.mxu0 0.0
    %315 = vmatprep.subr.mxu0 0.0
    %316 = vmatpush1.msra.mxu0 0.0
    %317 = vmatprep.subr.mxu0 0.0
    %318 = vmatpush1.msra.mxu0 0.0
    %319 = vmatprep.subr.mxu0 0.0
    %320 = vmatpush1.msra.mxu0 0.0
    %321 = vmatprep.subr.mxu0 0.0
    %322 = vmatpush1.msra.mxu0 0.0
    %323 = vmatprep.subr.mxu0 0.0
    %324 = vmatpush1.msra.mxu0 0.0
    %325 = vmatprep.subr.mxu0 0.0
    %326 = vmatpush1.msra.mxu0 0.0
    %327 = vmatprep.subr.mxu0 0.0
    %328 = vmatpush1.msra.mxu0 0.0
    %329 = vmatprep.subr.mxu0 0.0
    %330 = vmatpush1.msra.mxu0 0.0
    %331 = vmatprep.subr.mxu0 0.0
    %332 = vmatpush1.msra.mxu0 0.0
    %333 = vmatprep.subr.mxu0 0.0
    %334 = vmatpush1.msra.mxu0 0.0
    %335 = vmatprep.subr.mxu0 0.0
    %336 = vmatpush1.msra.mxu0 0.0
    %337 = vmatprep.mubr.f32.mxu0 0.0
    %338 = vmatmul.mubr.f32.gmra.mrb[0].mxu0 %v251
    %v339 = vpop.f32.mrb[0].mxu0
    %v340 = vadd.f32 %v272, %v339
    %v341 = vpop.f32.mrb[0].mxu0
    %342 = vdwg.mxu0
    %v343 = vmax.f32 %v340, 0.0
    %v344 = vld [vmem:[%s5] sm:$0x3]
    %v345 = vlaneseq
    %v346 = vshrl.u32 %v345, 7
    %v347 = vsub.s32 0, %v346
    %v348 = vrot.slane %v344, %v347
    %v349 = vmul.f32 %v343, %v348
    %v350 = vlaneseq
    %v351 = vshrl.u32 %v350, 7
    %v352 = vsub.s32 1, %v351
    %v353 = vrot.slane %v344, %v352
    %v354 = vadd.f32 %v349, %v353
    %355 = vst [vmem:[#allocation10] sm:$0xff] %v354
    // Predicated region
    $region42: #{tpu_custom_call.1} parent=1 // pred_check
      _
    $region43: #{tpu_custom_call.1} parent=1 // pred_check_branch
      %357 = sbr.rel (0) target = $region45
    $region44: #{tpu_custom_call.1} parent=1 // pred_region
      %s359 = ssub.s32 128, 128
      %360 = vsyncadd [#allocation4], %s359
      %s362 = sshll.u32 [#allocation10], 4
      %s363 = int_to_ptr.vmem [resolvable:$true] %s362
      %365 = dma.vmem_to_hbm [thread:$0]  %s363, 128, %s6, [#allocation4]
    $region45: #{tpu_custom_call.1} parent=1 // pred_fallthru
      _
    // Predicated region
    $region46: #{tpu_custom_call.1} parent=1 // pred_check
      _
    $region47: #{tpu_custom_call.1} parent=1 // pred_check_branch
      %367 = sbr.rel (0) target = $region49
    $region48: #{tpu_custom_call.1} parent=1 // pred_region
      %368 = dma.done [#allocation4], 128
    $region49: #{tpu_custom_call.1} parent=1 // pred_fallthru
      _
    %369 = vsyncpa [#allocation3], 1
    %370 = vsyncpa [#allocation6], 1
    %371 = vsyncpa [#allocation9], 1
    %372 = vsyncpa [#allocation4], 1

</llo_original>
